<compile_context>
chip_gen: v5e
topology: v5e:2x2
jax: 0.10.0
libtpu: 0.0.40
codegen_flags: <defaults>
</compile_context>

<pallas_src>
import functools

import jax
import jax.numpy as jnp
from jax.experimental import pallas as pl
from jax.experimental.pallas import tpu as pltpu


def _round_up(x, m):
    return ((x + m - 1) // m) * m


# -----------------------------------------------------------------------------
# Encoder kernel: SIGNEncoder fused per node tile + scoring-projection epilogue.
#   z    = bo + sum_h tanh(f_h @ W_h + b_h) @ Wo_h        (2*(num_hops+1) dots)
#   emb  = leaky_relu(z)                                   (f32 VPU)
#   T    = emb @ scoring                                   (one resident MXU push)
# Outputs emb and T, lane-padded to a multiple of 128 (padding lanes are zero).
# -----------------------------------------------------------------------------
def _encoder_kernel(n_hop, *refs):
    f_refs = refs[:n_hop]
    w_ref, b_ref, wo_ref, bo_ref, sc_ref, emb_ref, t_ref = refs[n_hop:]

    acc = None
    for h in range(n_hop):                     # static unroll, n_hop is small
        hid = jnp.tanh(
            jnp.dot(f_refs[h][...], w_ref[h],
                    preferred_element_type=jnp.float32) + b_ref[h])
        part = jnp.dot(hid, wo_ref[h], preferred_element_type=jnp.float32)
        acc = part if acc is None else acc + part
    z = acc + bo_ref[...]
    # F.leaky_relu default negative_slope = 0.01
    emb = jnp.where(z >= 0, z, 0.01 * z)
    emb_ref[...] = emb.astype(emb_ref.dtype)
    t = jnp.dot(emb, sc_ref[...], preferred_element_type=jnp.float32)
    t_ref[...] = t.astype(t_ref.dtype)


def encoder_forward(feats, w_list, b_list, wo, bo, scoring, *,
                    tile_n=1024, out_dtype=jnp.float32):
    """feats: list of (num_hops+1) arrays [N, in_feats].
    w_list[i]: [in_feats, hidden] (already transposed), b_list[i]: [1, hidden],
    wo: [(num_hops+1)*hidden, out_feats] (transposed), bo: [1, out_feats],
    scoring: [out_feats, out_feats].
    Returns (emb, T) each [N, out_pad] in out_dtype; extra lanes are exact zeros."""
    n_hop = len(feats)
    N, in_feats = feats[0].shape
    hidden = w_list[0].shape[1]
    out_feats = wo.shape[1]
    out_pad = _round_up(out_feats, 128)

    # Parameter-only packing (tiny; no activation HBM round trips).
    w_stack = jnp.stack(w_list, axis=0)                       # [n_hop, in, hid]
    b_stack = jnp.stack(b_list, axis=0)                       # [n_hop, 1, hid]
    wo_split = wo.reshape(n_hop, hidden, out_feats)           # per-hop Wo chunk
    wo_stack = jnp.zeros((n_hop, hidden, out_pad), jnp.float32
                         ).at[:, :, :out_feats].set(wo_split)
    bo_pad = jnp.zeros((1, out_pad), jnp.float32).at[:, :out_feats].set(bo)
    sc_pad = jnp.zeros((out_pad, out_pad), jnp.float32
                       ).at[:out_feats, :out_feats].set(scoring)

    # Row tiling: big tiles (HBM-bound), but keep >= 2 grid steps when there is
    # enough work so both v7x TensorCores get a share of the "parallel" axis.
    tile_n = min(tile_n, _round_up(N, 8))
    if N > 512:
        tile_n = min(tile_n, _round_up((N + 1) // 2, 8))
    n_pad = _round_up(N, tile_n)
    if n_pad != N:
        feats = [jnp.pad(f, ((0, n_pad - N), (0, 0))) for f in feats]

    out_isz = jnp.dtype(out_dtype).itemsize
    cost = pl.CostEstimate(
        flops=2 * n_pad * (n_hop * in_feats * hidden
                           + n_hop * hidden * out_pad + out_pad * out_pad),
        transcendentals=n_pad * n_hop * hidden,
        bytes_accessed=(n_pad * n_hop * in_feats * 4
                        + 4 * (w_stack.size + b_stack.size + wo_stack.size
                               + bo_pad.size + sc_pad.size)
                        + 2 * n_pad * out_pad * out_isz),
    )

    in_specs = (
        [pl.BlockSpec((tile_n, in_feats), lambda i: (i, 0)) for _ in range(n_hop)]
        + [
            pl.BlockSpec((n_hop, in_feats, hidden), lambda i: (0, 0, 0)),
            pl.BlockSpec((n_hop, 1, hidden), lambda i: (0, 0, 0)),
            pl.BlockSpec((n_hop, hidden, out_pad), lambda i: (0, 0, 0)),
            pl.BlockSpec((1, out_pad), lambda i: (0, 0)),
            pl.BlockSpec((out_pad, out_pad), lambda i: (0, 0)),
        ])

    emb, t = pl.pallas_call(
        functools.partial(_encoder_kernel, n_hop),
        out_shape=(jax.ShapeDtypeStruct((n_pad, out_pad), out_dtype),
                   jax.ShapeDtypeStruct((n_pad, out_pad), out_dtype)),
        grid=(n_pad // tile_n,),
        in_specs=in_specs,
        out_specs=[pl.BlockSpec((tile_n, out_pad), lambda i: (i, 0)),
                   pl.BlockSpec((tile_n, out_pad), lambda i: (i, 0))],
        compiler_params=pltpu.CompilerParams(
            dimension_semantics=("parallel",)),
        cost_estimate=cost,
    )(*feats, w_stack, b_stack, wo_stack, bo_pad, sc_pad)
    # Drop padded rows; keep padded lanes (zeros, consumed by the decoder).
    return emb[:N], t[:N]


# -----------------------------------------------------------------------------
# Decoder kernel: pure streaming — sigmoid(sum(T_drug * emb_disease, axis=1)).
# The D x D matmul already happened per node in the encoder epilogue.
# Lane-dense [rows, 128] score output (full vst stores).
# -----------------------------------------------------------------------------
def _decoder_kernel(tdrug_ref, edis_ref, out_ref):
    prod = tdrug_ref[...].astype(jnp.float32) * edis_ref[...].astype(jnp.float32)
    s = jnp.sum(prod, axis=1)                              # [tile_p] lane reduce
    out_ref[...] = jax.nn.sigmoid(s).reshape(out_ref.shape).astype(out_ref.dtype)


def decoder_forward(t_tab, emb_tab, drug_idx, disease_idx, *, tile_p=8192):
    """t_tab = emb @ scoring and emb_tab: [N, D] node tables (D lane-padded).
    drug_idx / disease_idx: [P] int32. Returns scores [P] in f32."""
    P = int(drug_idx.shape[0])
    D_in = t_tab.shape[1]
    D_pad = _round_up(D_in, 128)
    if D_pad != D_in:
        t_tab = jnp.pad(t_tab, ((0, 0), (0, D_pad - D_in)))
        emb_tab = jnp.pad(emb_tab, ((0, 0), (0, D_pad - D_in)))

    # Pair tiling: large tiles (HBM-bound); keep >= 2 grid steps for v7x when
    # there is enough work. Multi-step tiles are multiples of 1024 so the
    # [rows, 128] output block keeps 8-sublane alignment.
    if P <= 1024:
        tile_p = _round_up(max(P, 1), 128)
    else:
        tile_p = max(1024, _round_up(tile_p, 1024))
        tile_p = min(tile_p, max(1024, _round_up((P + 1) // 2, 1024)))
    p_pad = _round_up(P, tile_p)
    rows = tile_p // 128

    # Pad the (cheap) index vectors, then gather already-row-padded streams.
    # TODO(synk): fuse these gathers into the kernel (VMEM-resident [N,128]
    # tables + prefetched index vectors / in-kernel row gather) to remove the
    # [P,128] HBM write + read-back round trip of the gathered streams.
    if p_pad != P:
        drug_idx = jnp.pad(drug_idx, (0, p_pad - P))
        disease_idx = jnp.pad(disease_idx, (0, p_pad - P))
    t_drug = t_tab[drug_idx]           # [p_pad, D_pad]
    emb_dis = emb_tab[disease_idx]     # [p_pad, D_pad]

    isz = jnp.dtype(t_tab.dtype).itemsize
    cost = pl.CostEstimate(
        flops=2 * p_pad * D_pad,
        transcendentals=p_pad,
        bytes_accessed=2 * p_pad * D_pad * isz + p_pad * 4,
    )

    out = pl.pallas_call(
        _decoder_kernel,
        out_shape=jax.ShapeDtypeStruct((p_pad // 128, 128), jnp.float32),
        grid=(p_pad // tile_p,),
        in_specs=[
            pl.BlockSpec((tile_p, D_pad), lambda i: (i, 0)),
            pl.BlockSpec((tile_p, D_pad), lambda i: (i, 0)),
        ],
        out_specs=pl.BlockSpec((rows, 128), lambda i: (i, 0)),
        compiler_params=pltpu.CompilerParams(
            dimension_semantics=("parallel",)),
        cost_estimate=cost,
    )(t_drug, emb_dis)
    return out.reshape(p_pad)[:P]


# -----------------------------------------------------------------------------
# Full GDRnet forward
# -----------------------------------------------------------------------------
@functools.partial(jax.jit, static_argnames=("use_bf16",))
def gdrnet_forward(params, feats, drug_idx, disease_idx, use_bf16=False):
    out_dtype = jnp.bfloat16 if use_bf16 else jnp.float32
    emb, t = encoder_forward(feats,
                             params["w_t"], params["b"],
                             params["wo_t"], params["bo"],
                             params["scoring"],
                             out_dtype=out_dtype)
    return decoder_forward(t, emb, drug_idx, disease_idx)


# -----------------------------------------------------------------------------
# Pure-JAX reference (mirrors the PyTorch forward) for a correctness check.
# -----------------------------------------------------------------------------
def gdrnet_reference(params, feats, drug_idx, disease_idx):
    outs = []
    for i in range(len(feats)):
        h = jnp.tanh(feats[i] @ params["w_t"][i] + params["b"][i][0])
        outs.append(h)
    h_cat = jnp.concatenate(outs, axis=1)
    z = h_cat @ params["wo_t"] + params["bo"][0]
    emb = jnp.where(z >= 0, z, 0.01 * z)
    drug = emb[drug_idx]
    dis = emb[disease_idx]
    return jax.nn.sigmoid(jnp.sum(drug @ params["scoring"] * dis, axis=1))


if __name__ == "__main__":
    # Small shapes consistent with the module
    N = 32          # number of graph nodes
    in_feats = 16
    hidden = 32
    out_feats = 32
    num_hops = 2    # -> 3 hop feature matrices
    P = 8           # number of (drug, disease) pairs

    key = jax.random.PRNGKey(0)
    keys = jax.random.split(key, 16)

    # Precomputed hop features: list of (num_hops+1) arrays [N, in_feats]
    feats = [jax.random.normal(keys[i], (N, in_feats), jnp.float32)
             for i in range(num_hops + 1)]

    # Deterministic synthetic parameters (shapes per the PyTorch __init__):
    #   linears[i].weight: [hidden, in_feats] -> stored transposed [in_feats, hidden]
    #   out_layer.weight : [out_feats, 3*hidden] -> transposed [3*hidden, out_feats]
    #   scoring          : [out_feats, out_feats]
    params = {
        "w_t": [0.1 * jax.random.normal(keys[3 + i], (in_feats, hidden), jnp.float32)
                for i in range(num_hops + 1)],
        "b": [0.1 * jax.random.normal(keys[6 + i], (1, hidden), jnp.float32)
              for i in range(num_hops + 1)],
        "wo_t": 0.1 * jax.random.normal(keys[9], (3 * hidden, out_feats), jnp.float32),
        "bo": 0.1 * jax.random.normal(keys[10], (1, out_feats), jnp.float32),
        "scoring": jax.random.normal(keys[11], (out_feats, out_feats), jnp.float32),
    }

    drug_idx = jax.random.randint(keys[12], (P,), 0, N)
    disease_idx = jax.random.randint(keys[13], (P,), 0, N)

    ref = gdrnet_reference(params, feats, drug_idx, disease_idx)

    # f32 path (strict check)
    scores = gdrnet_forward(params, feats, drug_idx, disease_idx)
    scores = jax.block_until_ready(scores)
    assert scores.shape == (P,)
    assert jnp.allclose(scores, ref, rtol=1e-4, atol=1e-4), (scores, ref)

    # bf16 embedding/T-table path (loose check; exercises the mem-bound optimization)
    scores_bf16 = gdrnet_forward(params, feats, drug_idx, disease_idx, use_bf16=True)
    scores_bf16 = jax.block_until_ready(scores_bf16)
    assert jnp.allclose(scores_bf16, ref, rtol=5e-2, atol=5e-2), (scores_bf16, ref)

    print("KERNEL_OK")
</pallas_src>

<mosaic_0001>
module attributes {stable_mosaic.version = 11 : i64} {
  func.func @_encoder_kernel(%arg0: i32, %arg1: memref<32x16xf32, #tpu.memory_space<vmem>>, %arg2: memref<32x16xf32, #tpu.memory_space<vmem>>, %arg3: memref<32x16xf32, #tpu.memory_space<vmem>>, %arg4: memref<3x16x32xf32, #tpu.memory_space<vmem>>, %arg5: memref<3x1x32xf32, #tpu.memory_space<vmem>>, %arg6: memref<3x32x128xf32, #tpu.memory_space<vmem>>, %arg7: memref<1x128xf32, #tpu.memory_space<vmem>>, %arg8: memref<128x128xf32, #tpu.memory_space<vmem>>, %arg9: memref<32x128xf32, #tpu.memory_space<vmem>>, %arg10: memref<32x128xf32, #tpu.memory_space<vmem>>) attributes {dimension_semantics = [#tpu.dimension_semantics<parallel>], iteration_bounds = array<i64: 1>, scalar_prefetch = 0 : i64, scratch_operands = 0 : i64, tpu.core_type = #tpu.core_type<tc>, window_params = [{transform_indices = @transform_0, window_bounds = array<i64: 32, 16>}, {transform_indices = @transform_1, window_bounds = array<i64: 32, 16>}, {transform_indices = @transform_2, window_bounds = array<i64: 32, 16>}, {pipeline_mode = #tpu.pipeline_mode<synchronous>, transform_indices = @transform_3, window_bounds = array<i64: 3, 16, 32>}, {pipeline_mode = #tpu.pipeline_mode<synchronous>, transform_indices = @transform_4, window_bounds = array<i64: 3, 1, 32>}, {pipeline_mode = #tpu.pipeline_mode<synchronous>, transform_indices = @transform_5, window_bounds = array<i64: 3, 32, 128>}, {pipeline_mode = #tpu.pipeline_mode<synchronous>, transform_indices = @transform_6, window_bounds = array<i64: 1, 128>}, {pipeline_mode = #tpu.pipeline_mode<synchronous>, transform_indices = @transform_7, window_bounds = array<i64: 128, 128>}, {transform_indices = @transform_8, window_bounds = array<i64: 32, 128>}, {transform_indices = @transform_9, window_bounds = array<i64: 32, 128>}]} {
    %c0 = arith.constant 0 : index
    %c0_0 = arith.constant 0 : index
    %0 = vector.load %arg1[%c0, %c0_0] : memref<32x16xf32, #tpu.memory_space<vmem>>, vector<32x16xf32>
    %c0_1 = arith.constant 0 : index
    %c0_2 = arith.constant 0 : index
    %c0_3 = arith.constant 0 : index
    %1 = vector.load %arg4[%c0_1, %c0_2, %c0_3] : memref<3x16x32xf32, #tpu.memory_space<vmem>>, vector<1x16x32xf32>
    %2 = vector.shape_cast %1 : vector<1x16x32xf32> to vector<16x32xf32>
    %cst = arith.constant dense<0.000000e+00> : vector<32x32xf32>
    %3 = tpu.matmul %0, %2, %cst {dimension_numbers = #tpu.dot_dimension_numbers<[1], [0], [0], [1], [0, 0, 1, 1], [], []>} : vector<32x16xf32>, vector<16x32xf32>, vector<32x32xf32> -> vector<32x32xf32>
    %c0_4 = arith.constant 0 : index
    %c0_5 = arith.constant 0 : index
    %c0_6 = arith.constant 0 : index
    %4 = vector.load %arg5[%c0_4, %c0_5, %c0_6] : memref<3x1x32xf32, #tpu.memory_space<vmem>>, vector<1x1x32xf32>
    %5 = vector.shape_cast %4 : vector<1x1x32xf32> to vector<1x32xf32>
    %6 = vector.broadcast %5 : vector<1x32xf32> to vector<32x32xf32>
    %7 = arith.addf %3, %6 : vector<32x32xf32>
    %8 = math.tanh %7 : vector<32x32xf32>
    %c0_7 = arith.constant 0 : index
    %c0_8 = arith.constant 0 : index
    %c0_9 = arith.constant 0 : index
    %9 = vector.load %arg6[%c0_7, %c0_8, %c0_9] : memref<3x32x128xf32, #tpu.memory_space<vmem>>, vector<1x32x128xf32>
    %10 = vector.shape_cast %9 : vector<1x32x128xf32> to vector<32x128xf32>
    %cst_10 = arith.constant dense<0.000000e+00> : vector<32x128xf32>
    %11 = tpu.matmul %8, %10, %cst_10 {dimension_numbers = #tpu.dot_dimension_numbers<[1], [0], [0], [1], [0, 0, 1, 1], [], []>} : vector<32x32xf32>, vector<32x128xf32>, vector<32x128xf32> -> vector<32x128xf32>
    %c0_11 = arith.constant 0 : index
    %c0_12 = arith.constant 0 : index
    %12 = vector.load %arg2[%c0_11, %c0_12] : memref<32x16xf32, #tpu.memory_space<vmem>>, vector<32x16xf32>
    %c1 = arith.constant 1 : index
    %c0_13 = arith.constant 0 : index
    %c0_14 = arith.constant 0 : index
    %13 = vector.load %arg4[%c1, %c0_13, %c0_14] : memref<3x16x32xf32, #tpu.memory_space<vmem>>, vector<1x16x32xf32>
    %14 = vector.shape_cast %13 : vector<1x16x32xf32> to vector<16x32xf32>
    %cst_15 = arith.constant dense<0.000000e+00> : vector<32x32xf32>
    %15 = tpu.matmul %12, %14, %cst_15 {dimension_numbers = #tpu.dot_dimension_numbers<[1], [0], [0], [1], [0, 0, 1, 1], [], []>} : vector<32x16xf32>, vector<16x32xf32>, vector<32x32xf32> -> vector<32x32xf32>
    %c1_16 = arith.constant 1 : index
    %c0_17 = arith.constant 0 : index
    %c0_18 = arith.constant 0 : index
    %16 = vector.load %arg5[%c1_16, %c0_17, %c0_18] : memref<3x1x32xf32, #tpu.memory_space<vmem>>, vector<1x1x32xf32>
    %17 = vector.shape_cast %16 : vector<1x1x32xf32> to vector<1x32xf32>
    %18 = vector.broadcast %17 : vector<1x32xf32> to vector<32x32xf32>
    %19 = arith.addf %15, %18 : vector<32x32xf32>
    %20 = math.tanh %19 : vector<32x32xf32>
    %c1_19 = arith.constant 1 : index
    %c0_20 = arith.constant 0 : index
    %c0_21 = arith.constant 0 : index
    %21 = vector.load %arg6[%c1_19, %c0_20, %c0_21] : memref<3x32x128xf32, #tpu.memory_space<vmem>>, vector<1x32x128xf32>
    %22 = vector.shape_cast %21 : vector<1x32x128xf32> to vector<32x128xf32>
    %cst_22 = arith.constant dense<0.000000e+00> : vector<32x128xf32>
    %23 = tpu.matmul %20, %22, %cst_22 {dimension_numbers = #tpu.dot_dimension_numbers<[1], [0], [0], [1], [0, 0, 1, 1], [], []>} : vector<32x32xf32>, vector<32x128xf32>, vector<32x128xf32> -> vector<32x128xf32>
    %24 = arith.addf %11, %23 : vector<32x128xf32>
    %c0_23 = arith.constant 0 : index
    %c0_24 = arith.constant 0 : index
    %25 = vector.load %arg3[%c0_23, %c0_24] : memref<32x16xf32, #tpu.memory_space<vmem>>, vector<32x16xf32>
    %c2 = arith.constant 2 : index
    %c0_25 = arith.constant 0 : index
    %c0_26 = arith.constant 0 : index
    %26 = vector.load %arg4[%c2, %c0_25, %c0_26] : memref<3x16x32xf32, #tpu.memory_space<vmem>>, vector<1x16x32xf32>
    %27 = vector.shape_cast %26 : vector<1x16x32xf32> to vector<16x32xf32>
    %cst_27 = arith.constant dense<0.000000e+00> : vector<32x32xf32>
    %28 = tpu.matmul %25, %27, %cst_27 {dimension_numbers = #tpu.dot_dimension_numbers<[1], [0], [0], [1], [0, 0, 1, 1], [], []>} : vector<32x16xf32>, vector<16x32xf32>, vector<32x32xf32> -> vector<32x32xf32>
    %c2_28 = arith.constant 2 : index
    %c0_29 = arith.constant 0 : index
    %c0_30 = arith.constant 0 : index
    %29 = vector.load %arg5[%c2_28, %c0_29, %c0_30] : memref<3x1x32xf32, #tpu.memory_space<vmem>>, vector<1x1x32xf32>
    %30 = vector.shape_cast %29 : vector<1x1x32xf32> to vector<1x32xf32>
    %31 = vector.broadcast %30 : vector<1x32xf32> to vector<32x32xf32>
    %32 = arith.addf %28, %31 : vector<32x32xf32>
    %33 = math.tanh %32 : vector<32x32xf32>
    %c2_31 = arith.constant 2 : index
    %c0_32 = arith.constant 0 : index
    %c0_33 = arith.constant 0 : index
    %34 = vector.load %arg6[%c2_31, %c0_32, %c0_33] : memref<3x32x128xf32, #tpu.memory_space<vmem>>, vector<1x32x128xf32>
    %35 = vector.shape_cast %34 : vector<1x32x128xf32> to vector<32x128xf32>
    %cst_34 = arith.constant dense<0.000000e+00> : vector<32x128xf32>
    %36 = tpu.matmul %33, %35, %cst_34 {dimension_numbers = #tpu.dot_dimension_numbers<[1], [0], [0], [1], [0, 0, 1, 1], [], []>} : vector<32x32xf32>, vector<32x128xf32>, vector<32x128xf32> -> vector<32x128xf32>
    %37 = arith.addf %24, %36 : vector<32x128xf32>
    %c0_35 = arith.constant 0 : index
    %c0_36 = arith.constant 0 : index
    %38 = vector.load %arg7[%c0_35, %c0_36] : memref<1x128xf32, #tpu.memory_space<vmem>>, vector<1x128xf32>
    %39 = vector.broadcast %38 : vector<1x128xf32> to vector<32x128xf32>
    %40 = arith.addf %37, %39 : vector<32x128xf32>
    %cst_37 = arith.constant 0.000000e+00 : f32
    %41 = vector.broadcast %cst_37 : f32 to vector<32x128xf32>
    %42 = arith.cmpf oge, %40, %41 : vector<32x128xf32>
    %cst_38 = arith.constant 0.00999999977 : f32
    %43 = vector.broadcast %cst_38 : f32 to vector<32x128xf32>
    %44 = arith.mulf %43, %40 : vector<32x128xf32>
    %45 = arith.select %42, %40, %44 : vector<32x128xi1>, vector<32x128xf32>
    %c0_39 = arith.constant 0 : index
    %c0_40 = arith.constant 0 : index
    %46 = vector.load %arg9[%c0_39, %c0_40] : memref<32x128xf32, #tpu.memory_space<vmem>>, vector<32x128xf32>
    tpu.vector_store %arg9[%c0_39, %c0_40], %45 {strides = array<i32>} : memref<32x128xf32, #tpu.memory_space<vmem>>, vector<32x128xf32>,
    %c0_41 = arith.constant 0 : index
    %c0_42 = arith.constant 0 : index
    %47 = vector.load %arg8[%c0_41, %c0_42] : memref<128x128xf32, #tpu.memory_space<vmem>>, vector<128x128xf32>
    %cst_43 = arith.constant dense<0.000000e+00> : vector<32x128xf32>
    %48 = tpu.matmul %45, %47, %cst_43 {dimension_numbers = #tpu.dot_dimension_numbers<[1], [0], [0], [1], [0, 0, 1, 1], [], []>} : vector<32x128xf32>, vector<128x128xf32>, vector<32x128xf32> -> vector<32x128xf32>
    %c0_44 = arith.constant 0 : index
    %c0_45 = arith.constant 0 : index
    %49 = vector.load %arg10[%c0_44, %c0_45] : memref<32x128xf32, #tpu.memory_space<vmem>>, vector<32x128xf32>
    tpu.vector_store %arg10[%c0_44, %c0_45], %48 {strides = array<i32>} : memref<32x128xf32, #tpu.memory_space<vmem>>, vector<32x128xf32>,
    return
  }
  func.func @transform_0(%arg0: i32) -> (i32, i32) {
    %c0_i32 = arith.constant 0 : i32
    %c0_i32_0 = arith.constant 0 : i32
    return %arg0, %c0_i32 : i32, i32
  }
  func.func @transform_1(%arg0: i32) -> (i32, i32) {
    %c0_i32 = arith.constant 0 : i32
    %c0_i32_0 = arith.constant 0 : i32
    return %arg0, %c0_i32 : i32, i32
  }
  func.func @transform_2(%arg0: i32) -> (i32, i32) {
    %c0_i32 = arith.constant 0 : i32
    %c0_i32_0 = arith.constant 0 : i32
    return %arg0, %c0_i32 : i32, i32
  }
  func.func @transform_3(%arg0: i32) -> (i32, i32, i32) {
    %c0_i32 = arith.constant 0 : i32
    %c0_i32_0 = arith.constant 0 : i32
    %c0_i32_1 = arith.constant 0 : i32
    %c0_i32_2 = arith.constant 0 : i32
    return %c0_i32, %c0_i32_0, %c0_i32_1 : i32, i32, i32
  }
  func.func @transform_4(%arg0: i32) -> (i32, i32, i32) {
    %c0_i32 = arith.constant 0 : i32
    %c0_i32_0 = arith.constant 0 : i32
    %c0_i32_1 = arith.constant 0 : i32
    %c0_i32_2 = arith.constant 0 : i32
    return %c0_i32, %c0_i32_0, %c0_i32_1 : i32, i32, i32
  }
  func.func @transform_5(%arg0: i32) -> (i32, i32, i32) {
    %c0_i32 = arith.constant 0 : i32
    %c0_i32_0 = arith.constant 0 : i32
    %c0_i32_1 = arith.constant 0 : i32
    %c0_i32_2 = arith.constant 0 : i32
    return %c0_i32, %c0_i32_0, %c0_i32_1 : i32, i32, i32
  }
  func.func @transform_6(%arg0: i32) -> (i32, i32) {
    %c0_i32 = arith.constant 0 : i32
    %c0_i32_0 = arith.constant 0 : i32
    %c0_i32_1 = arith.constant 0 : i32
    return %c0_i32, %c0_i32_0 : i32, i32
  }
  func.func @transform_7(%arg0: i32) -> (i32, i32) {
    %c0_i32 = arith.constant 0 : i32
    %c0_i32_0 = arith.constant 0 : i32
    %c0_i32_1 = arith.constant 0 : i32
    return %c0_i32, %c0_i32_0 : i32, i32
  }
  func.func @transform_8(%arg0: i32) -> (i32, i32) {
    %c0_i32 = arith.constant 0 : i32
    %c0_i32_0 = arith.constant 0 : i32
    return %arg0, %c0_i32 : i32, i32
  }
  func.func @transform_9(%arg0: i32) -> (i32, i32) {
    %c0_i32 = arith.constant 0 : i32
    %c0_i32_0 = arith.constant 0 : i32
    return %arg0, %c0_i32 : i32, i32
  }
}

module attributes {stable_mosaic.version = 11 : i64} {
  func.func @_decoder_kernel(%arg0: i32, %arg1: memref<128x128xf32, #tpu.memory_space<vmem>>, %arg2: memref<128x128xf32, #tpu.memory_space<vmem>>, %arg3: memref<1x128xf32, #tpu.memory_space<vmem>>) attributes {dimension_semantics = [#tpu.dimension_semantics<parallel>], iteration_bounds = array<i64: 1>, scalar_prefetch = 0 : i64, scratch_operands = 0 : i64, tpu.core_type = #tpu.core_type<tc>, window_params = [{transform_indices = @transform_0, window_bounds = array<i64: 128, 128>}, {transform_indices = @transform_1, window_bounds = array<i64: 128, 128>}, {transform_indices = @transform_2, window_bounds = array<i64: 1, 128>}]} {
    %c0 = arith.constant 0 : index
    %c0_0 = arith.constant 0 : index
    %0 = vector.load %arg1[%c0, %c0_0] : memref<128x128xf32, #tpu.memory_space<vmem>>, vector<128x128xf32>
    %c0_1 = arith.constant 0 : index
    %c0_2 = arith.constant 0 : index
    %1 = vector.load %arg2[%c0_1, %c0_2] : memref<128x128xf32, #tpu.memory_space<vmem>>, vector<128x128xf32>
    %2 = arith.mulf %0, %1 : vector<128x128xf32>
    %cst = arith.constant dense<0.000000e+00> : vector<128xf32>
    %3 = vector.multi_reduction <add>, %2, %cst [1] : vector<128x128xf32> to vector<128xf32>
    %4 = arith.negf %3 : vector<128xf32>
    %5 = math.exp %4 : vector<128xf32>
    %cst_3 = arith.constant 1.000000e+00 : f32
    %6 = vector.broadcast %cst_3 : f32 to vector<128xf32>
    %7 = arith.addf %6, %5 : vector<128xf32>
    %8 = arith.divf %6, %7 : vector<128xf32>
    %9 = vector.shape_cast %8 : vector<128xf32> to vector<1x128xf32>
    %c0_4 = arith.constant 0 : index
    %c0_5 = arith.constant 0 : index
    %10 = vector.load %arg3[%c0_4, %c0_5] : memref<1x128xf32, #tpu.memory_space<vmem>>, vector<1x128xf32>
    tpu.vector_store %arg3[%c0_4, %c0_5], %9 {strides = array<i32>} : memref<1x128xf32, #tpu.memory_space<vmem>>, vector<1x128xf32>,
    return
  }
  func.func @transform_0(%arg0: i32) -> (i32, i32) {
    %c0_i32 = arith.constant 0 : i32
    %c0_i32_0 = arith.constant 0 : i32
    return %arg0, %c0_i32 : i32, i32
  }
  func.func @transform_1(%arg0: i32) -> (i32, i32) {
    %c0_i32 = arith.constant 0 : i32
    %c0_i32_0 = arith.constant 0 : i32
    return %arg0, %c0_i32 : i32, i32
  }
  func.func @transform_2(%arg0: i32) -> (i32, i32) {
    %c0_i32 = arith.constant 0 : i32
    %c0_i32_0 = arith.constant 0 : i32
    return %arg0, %c0_i32 : i32, i32
  }
}

</mosaic_0001>

<llo_original>
// kernel: gdrnet_forward.3
$region0: #{gdrnet_forward.3}
  #allocation0 [shape = 'u32[]', space=smem, size = 0x4, offset = 0x4, fixed_abs, tag = 'smem constant byte address 0x4 - core index']
  #allocation1 [shape = 'u32[72,128]{1,0:T(1,128)}', space=vmem, size = 0x9000, scoped, tag = 'internal scratch']
  %s0 = inlined_call_operand.vmem [shape: f32[128,128], index: 0, kind: input, shape index: {}]
  %s1 = inlined_call_operand.vmem [shape: f32[128,128], index: 1, kind: input, shape index: {}]
  %s2 = inlined_call_operand.vmem [shape: f32[1,128], index: 2, kind: output, shape index: {}]
  %s3 = sld [smem:[#allocation0]]
  $region18: #{gdrnet_forward.3} parent=0
    _
  %s5 = ssub.s32 1, %s3
  %s6 = scalar_select 0, %s5, %s3
  // Predicated region
  $region2: #{gdrnet_forward.3} parent=0 // pred_check
    _
  $region3: #{gdrnet_forward.3} parent=0 // pred_check_branch
    %8 = sbr.rel (0) target = $region5
  $region4: #{gdrnet_forward.3} parent=0 // pred_region
    _
  $region5: #{gdrnet_forward.3} parent=0 // pred_fallthru
    _
  // Predicated region
  $region6: #{gdrnet_forward.3} parent=0 // pred_check
    _
  $region7: #{gdrnet_forward.3} parent=0 // pred_check_branch
    %10 = sbr.rel (0) target = $region9
  $region8: #{gdrnet_forward.3} parent=0 // pred_region
    _
  $region9: #{gdrnet_forward.3} parent=0 // pred_fallthru
    _
  %v11 = vld [vmem:[%s0] sm:$0xff]
  %v12 = vld [vmem:[%s0 + $0x8] sm:$0xff]
  %v13 = vld [vmem:[%s0 + $0x10] sm:$0xff]
  %v14 = vld [vmem:[%s0 + $0x18] sm:$0xff]
  %v15 = vld [vmem:[%s0 + $0x20] sm:$0xff]
  %v16 = vld [vmem:[%s0 + $0x28] sm:$0xff]
  %v17 = vld [vmem:[%s0 + $0x30] sm:$0xff]
  %v18 = vld [vmem:[%s0 + $0x38] sm:$0xff]
  %v19 = vld [vmem:[%s0 + $0x40] sm:$0xff]
  %v20 = vld [vmem:[%s0 + $0x48] sm:$0xff]
  %v21 = vld [vmem:[%s0 + $0x50] sm:$0xff]
  %v22 = vld [vmem:[%s0 + $0x58] sm:$0xff]
  %v23 = vld [vmem:[%s0 + $0x60] sm:$0xff]
  %v24 = vld [vmem:[%s0 + $0x68] sm:$0xff]
  %v25 = vld [vmem:[%s0 + $0x70] sm:$0xff]
  %v26 = vld [vmem:[%s0 + $0x78] sm:$0xff]
  %v27 = vld [vmem:[%s1] sm:$0xff]
  %v28 = vld [vmem:[%s1 + $0x8] sm:$0xff]
  %v29 = vld [vmem:[%s1 + $0x10] sm:$0xff]
  %v30 = vld [vmem:[%s1 + $0x18] sm:$0xff]
  %v31 = vld [vmem:[%s1 + $0x20] sm:$0xff]
  %v32 = vld [vmem:[%s1 + $0x28] sm:$0xff]
  %v33 = vld [vmem:[%s1 + $0x30] sm:$0xff]
  %v34 = vld [vmem:[%s1 + $0x38] sm:$0xff]
  %v35 = vld [vmem:[%s1 + $0x40] sm:$0xff]
  %v36 = vld [vmem:[%s1 + $0x48] sm:$0xff]
  %v37 = vld [vmem:[%s1 + $0x50] sm:$0xff]
  %v38 = vld [vmem:[%s1 + $0x58] sm:$0xff]
  %v39 = vld [vmem:[%s1 + $0x60] sm:$0xff]
  %v40 = vld [vmem:[%s1 + $0x68] sm:$0xff]
  %v41 = vld [vmem:[%s1 + $0x70] sm:$0xff]
  %v42 = vld [vmem:[%s1 + $0x78] sm:$0xff]
  %v43 = vmul.f32 %v11, %v27
  %v44 = vmul.f32 %v12, %v28
  %v45 = vmul.f32 %v13, %v29
  %v46 = vmul.f32 %v14, %v30
  %v47 = vmul.f32 %v15, %v31
  %v48 = vmul.f32 %v16, %v32
  %v49 = vmul.f32 %v17, %v33
  %v50 = vmul.f32 %v18, %v34
  %v51 = vmul.f32 %v19, %v35
  %v52 = vmul.f32 %v20, %v36
  %v53 = vmul.f32 %v21, %v37
  %v54 = vmul.f32 %v22, %v38
  %v55 = vmul.f32 %v23, %v39
  %v56 = vmul.f32 %v24, %v40
  %v57 = vmul.f32 %v25, %v41
  %v58 = vmul.f32 %v26, %v42
  %59 = vadd.xlane.f32.xlu0 %v43
  %v60 = vpop.xlane.xlu0 %59
  %61 = vadd.xlane.f32.xlu0 %v44
  %v62 = vpop.xlane.xlu0 %61
  %63 = vadd.xlane.f32.xlu0 %v45
  %v64 = vpop.xlane.xlu0 %63
  %65 = vadd.xlane.f32.xlu0 %v46
  %v66 = vpop.xlane.xlu0 %65
  %67 = vadd.xlane.f32.xlu0 %v47
  %v68 = vpop.xlane.xlu0 %67
  %69 = vadd.xlane.f32.xlu0 %v48
  %v70 = vpop.xlane.xlu0 %69
  %71 = vadd.xlane.f32.xlu0 %v49
  %v72 = vpop.xlane.xlu0 %71
  %73 = vadd.xlane.f32.xlu0 %v50
  %v74 = vpop.xlane.xlu0 %73
  %75 = vadd.xlane.f32.xlu0 %v51
  %v76 = vpop.xlane.xlu0 %75
  %77 = vadd.xlane.f32.xlu0 %v52
  %v78 = vpop.xlane.xlu0 %77
  %79 = vadd.xlane.f32.xlu0 %v53
  %v80 = vpop.xlane.xlu0 %79
  %81 = vadd.xlane.f32.xlu0 %v54
  %v82 = vpop.xlane.xlu0 %81
  %83 = vadd.xlane.f32.xlu0 %v55
  %v84 = vpop.xlane.xlu0 %83
  %85 = vadd.xlane.f32.xlu0 %v56
  %v86 = vpop.xlane.xlu0 %85
  %87 = vadd.xlane.f32.xlu0 %v57
  %v88 = vpop.xlane.xlu0 %87
  %89 = vadd.xlane.f32.xlu0 %v58
  %v90 = vpop.xlane.xlu0 %89
  %v91 = vxor.u32 %v60, 2147483648
  %v92 = vxor.u32 %v62, 2147483648
  %v93 = vxor.u32 %v64, 2147483648
  %v94 = vxor.u32 %v66, 2147483648
  %v95 = vxor.u32 %v68, 2147483648
  %v96 = vxor.u32 %v70, 2147483648
  %v97 = vxor.u32 %v72, 2147483648
  %v98 = vxor.u32 %v74, 2147483648
  %v99 = vxor.u32 %v76, 2147483648
  %v100 = vxor.u32 %v78, 2147483648
  %v101 = vxor.u32 %v80, 2147483648
  %v102 = vxor.u32 %v82, 2147483648
  %v103 = vxor.u32 %v84, 2147483648
  %v104 = vxor.u32 %v86, 2147483648
  %v105 = vxor.u32 %v88, 2147483648
  %v106 = vxor.u32 %v90, 2147483648
  %v107 = vmul.f32 %v91, 1.442695
  %v108 = vpow.pop %v107
  %v109 = vmul.f32 %v92, 1.442695
  %v110 = vpow.pop %v109
  %v111 = vmul.f32 %v93, 1.442695
  %v112 = vpow.pop %v111
  %v113 = vmul.f32 %v94, 1.442695
  %v114 = vpow.pop %v113
  %v115 = vmul.f32 %v95, 1.442695
  %v116 = vpow.pop %v115
  %v117 = vmul.f32 %v96, 1.442695
  %v118 = vpow.pop %v117
  %v119 = vmul.f32 %v97, 1.442695
  %v120 = vpow.pop %v119
  %v121 = vmul.f32 %v98, 1.442695
  %v122 = vpow.pop %v121
  %v123 = vmul.f32 %v99, 1.442695
  %v124 = vpow.pop %v123
  %v125 = vmul.f32 %v100, 1.442695
  %v126 = vpow.pop %v125
  %v127 = vmul.f32 %v101, 1.442695
  %v128 = vpow.pop %v127
  %v129 = vmul.f32 %v102, 1.442695
  %v130 = vpow.pop %v129
  %v131 = vmul.f32 %v103, 1.442695
  %v132 = vpow.pop %v131
  %v133 = vmul.f32 %v104, 1.442695
  %v134 = vpow.pop %v133
  %v135 = vmul.f32 %v105, 1.442695
  %v136 = vpow.pop %v135
  %v137 = vmul.f32 %v106, 1.442695
  %v138 = vpow.pop %v137
  %v139 = vadd.f32 %v108, 1.0
  %v140 = vadd.f32 %v110, 1.0
  %v141 = vadd.f32 %v112, 1.0
  %v142 = vadd.f32 %v114, 1.0
  %v143 = vadd.f32 %v116, 1.0
  %v144 = vadd.f32 %v118, 1.0
  %v145 = vadd.f32 %v120, 1.0
  %v146 = vadd.f32 %v122, 1.0
  %v147 = vadd.f32 %v124, 1.0
  %v148 = vadd.f32 %v126, 1.0
  %v149 = vadd.f32 %v128, 1.0
  %v150 = vadd.f32 %v130, 1.0
  %v151 = vadd.f32 %v132, 1.0
  %v152 = vadd.f32 %v134, 1.0
  %v153 = vadd.f32 %v136, 1.0
  %v154 = vadd.f32 %v138, 1.0
  %v155 = vrcp.pop %v139
  %v156 = vmul.f32 %v139, %v155
  %v157 = vsub.f32 1.0, %v156
  %v158 = vmul.f32 %v155, %v157
  %v159 = vadd.f32 %v155, %v158
  %vm160 = vweird.f32 %v139
  %vm161 = vweird.f32 %v155
  %vm162 = vmor %vm160, %vm161
  %v163 = vsel %vm162, %v155, %v159
  %v164 = vand.u32 2147483647, %v139
  %vm165 = vcmp.eq.f32.partialorder %v164, 8.507059e+37
  %v166 = vand.u32 %v139, 2147483648
  %v167 = vor.u32 1.1754944e-38, %v166
  %v168 = vsel %vm165, %v167, %v163
  %v169 = vmul.f32 1.0, %v168
  %v170 = vrcp.pop %v140
  %v171 = vmul.f32 %v140, %v170
  %v172 = vsub.f32 1.0, %v171
  %v173 = vmul.f32 %v170, %v172
  %v174 = vadd.f32 %v170, %v173
  %vm175 = vweird.f32 %v140
  %vm176 = vweird.f32 %v170
  %vm177 = vmor %vm175, %vm176
  %v178 = vsel %vm177, %v170, %v174
  %v179 = vand.u32 2147483647, %v140
  %vm180 = vcmp.eq.f32.partialorder %v179, 8.507059e+37
  %v181 = vand.u32 %v140, 2147483648
  %v182 = vor.u32 1.1754944e-38, %v181
  %v183 = vsel %vm180, %v182, %v178
  %v184 = vmul.f32 1.0, %v183
  %v185 = vrcp.pop %v141
  %v186 = vmul.f32 %v141, %v185
  %v187 = vsub.f32 1.0, %v186
  %v188 = vmul.f32 %v185, %v187
  %v189 = vadd.f32 %v185, %v188
  %vm190 = vweird.f32 %v141
  %vm191 = vweird.f32 %v185
  %vm192 = vmor %vm190, %vm191
  %v193 = vsel %vm192, %v185, %v189
  %v194 = vand.u32 2147483647, %v141
  %vm195 = vcmp.eq.f32.partialorder %v194, 8.507059e+37
  %v196 = vand.u32 %v141, 2147483648
  %v197 = vor.u32 1.1754944e-38, %v196
  %v198 = vsel %vm195, %v197, %v193
  %v199 = vmul.f32 1.0, %v198
  %v200 = vrcp.pop %v142
  %v201 = vmul.f32 %v142, %v200
  %v202 = vsub.f32 1.0, %v201
  %v203 = vmul.f32 %v200, %v202
  %v204 = vadd.f32 %v200, %v203
  %vm205 = vweird.f32 %v142
  %vm206 = vweird.f32 %v200
  %vm207 = vmor %vm205, %vm206
  %v208 = vsel %vm207, %v200, %v204
  %v209 = vand.u32 2147483647, %v142
  %vm210 = vcmp.eq.f32.partialorder %v209, 8.507059e+37
  %v211 = vand.u32 %v142, 2147483648
  %v212 = vor.u32 1.1754944e-38, %v211
  %v213 = vsel %vm210, %v212, %v208
  %v214 = vmul.f32 1.0, %v213
  %v215 = vrcp.pop %v143
  %v216 = vmul.f32 %v143, %v215
  %v217 = vsub.f32 1.0, %v216
  %v218 = vmul.f32 %v215, %v217
  %v219 = vadd.f32 %v215, %v218
  %vm220 = vweird.f32 %v143
  %vm221 = vweird.f32 %v215
  %vm222 = vmor %vm220, %vm221
  %v223 = vsel %vm222, %v215, %v219
  %v224 = vand.u32 2147483647, %v143
  %vm225 = vcmp.eq.f32.partialorder %v224, 8.507059e+37
  %v226 = vand.u32 %v143, 2147483648
  %v227 = vor.u32 1.1754944e-38, %v226
  %v228 = vsel %vm225, %v227, %v223
  %v229 = vmul.f32 1.0, %v228
  %v230 = vrcp.pop %v144
  %v231 = vmul.f32 %v144, %v230
  %v232 = vsub.f32 1.0, %v231
  %v233 = vmul.f32 %v230, %v232
  %v234 = vadd.f32 %v230, %v233
  %vm235 = vweird.f32 %v144
  %vm236 = vweird.f32 %v230
  %vm237 = vmor %vm235, %vm236
  %v238 = vsel %vm237, %v230, %v234
  %v239 = vand.u32 2147483647, %v144
  %vm240 = vcmp.eq.f32.partialorder %v239, 8.507059e+37
  %v241 = vand.u32 %v144, 2147483648
  %v242 = vor.u32 1.1754944e-38, %v241
  %v243 = vsel %vm240, %v242, %v238
  %v244 = vmul.f32 1.0, %v243
  %v245 = vrcp.pop %v145
  %v246 = vmul.f32 %v145, %v245
  %v247 = vsub.f32 1.0, %v246
  %v248 = vmul.f32 %v245, %v247
  %v249 = vadd.f32 %v245, %v248
  %vm250 = vweird.f32 %v145
  %vm251 = vweird.f32 %v245
  %vm252 = vmor %vm250, %vm251
  %v253 = vsel %vm252, %v245, %v249
  %v254 = vand.u32 2147483647, %v145
  %vm255 = vcmp.eq.f32.partialorder %v254, 8.507059e+37
  %v256 = vand.u32 %v145, 2147483648
  %v257 = vor.u32 1.1754944e-38, %v256
  %v258 = vsel %vm255, %v257, %v253
  %v259 = vmul.f32 1.0, %v258
  %v260 = vrcp.pop %v146
  %v261 = vmul.f32 %v146, %v260
  %v262 = vsub.f32 1.0, %v261
  %v263 = vmul.f32 %v260, %v262
  %v264 = vadd.f32 %v260, %v263
  %vm265 = vweird.f32 %v146
  %vm266 = vweird.f32 %v260
  %vm267 = vmor %vm265, %vm266
  %v268 = vsel %vm267, %v260, %v264
  %v269 = vand.u32 2147483647, %v146
  %vm270 = vcmp.eq.f32.partialorder %v269, 8.507059e+37
  %v271 = vand.u32 %v146, 2147483648
  %v272 = vor.u32 1.1754944e-38, %v271
  %v273 = vsel %vm270, %v272, %v268
  %v274 = vmul.f32 1.0, %v273
  %v275 = vrcp.pop %v147
  %v276 = vmul.f32 %v147, %v275
  %v277 = vsub.f32 1.0, %v276
  %v278 = vmul.f32 %v275, %v277
  %v279 = vadd.f32 %v275, %v278
  %vm280 = vweird.f32 %v147
  %vm281 = vweird.f32 %v275
  %vm282 = vmor %vm280, %vm281
  %v283 = vsel %vm282, %v275, %v279
  %v284 = vand.u32 2147483647, %v147
  %vm285 = vcmp.eq.f32.partialorder %v284, 8.507059e+37
  %v286 = vand.u32 %v147, 2147483648
  %v287 = vor.u32 1.1754944e-38, %v286
  %v288 = vsel %vm285, %v287, %v283
  %v289 = vmul.f32 1.0, %v288
  %v290 = vrcp.pop %v148
  %v291 = vmul.f32 %v148, %v290
  %v292 = vsub.f32 1.0, %v291
  %v293 = vmul.f32 %v290, %v292
  %v294 = vadd.f32 %v290, %v293
  %vm295 = vweird.f32 %v148
  %vm296 = vweird.f32 %v290
  %vm297 = vmor %vm295, %vm296
  %v298 = vsel %vm297, %v290, %v294
  %v299 = vand.u32 2147483647, %v148
  %vm300 = vcmp.eq.f32.partialorder %v299, 8.507059e+37
  %v301 = vand.u32 %v148, 2147483648
  %v302 = vor.u32 1.1754944e-38, %v301
  %v303 = vsel %vm300, %v302, %v298
  %v304 = vmul.f32 1.0, %v303
  %v305 = vrcp.pop %v149
  %v306 = vmul.f32 %v149, %v305
  %v307 = vsub.f32 1.0, %v306
  %v308 = vmul.f32 %v305, %v307
  %v309 = vadd.f32 %v305, %v308
  %vm310 = vweird.f32 %v149
  %vm311 = vweird.f32 %v305
  %vm312 = vmor %vm310, %vm311
  %v313 = vsel %vm312, %v305, %v309
  %v314 = vand.u32 2147483647, %v149
  %vm315 = vcmp.eq.f32.partialorder %v314, 8.507059e+37
  %v316 = vand.u32 %v149, 2147483648
  %v317 = vor.u32 1.1754944e-38, %v316
  %v318 = vsel %vm315, %v317, %v313
  %v319 = vmul.f32 1.0, %v318
  %v320 = vrcp.pop %v150
  %v321 = vmul.f32 %v150, %v320
  %v322 = vsub.f32 1.0, %v321
  %v323 = vmul.f32 %v320, %v322
  %v324 = vadd.f32 %v320, %v323
  %vm325 = vweird.f32 %v150
  %vm326 = vweird.f32 %v320
  %vm327 = vmor %vm325, %vm326
  %v328 = vsel %vm327, %v320, %v324
  %v329 = vand.u32 2147483647, %v150
  %vm330 = vcmp.eq.f32.partialorder %v329, 8.507059e+37
  %v331 = vand.u32 %v150, 2147483648
  %v332 = vor.u32 1.1754944e-38, %v331
  %v333 = vsel %vm330, %v332, %v328
  %v334 = vmul.f32 1.0, %v333
  %v335 = vrcp.pop %v151
  %v336 = vmul.f32 %v151, %v335
  %v337 = vsub.f32 1.0, %v336
  %v338 = vmul.f32 %v335, %v337
  %v339 = vadd.f32 %v335, %v338
  %vm340 = vweird.f32 %v151
  %vm341 = vweird.f32 %v335
  %vm342 = vmor %vm340, %vm341
  %v343 = vsel %vm342, %v335, %v339
  %v344 = vand.u32 2147483647, %v151
  %vm345 = vcmp.eq.f32.partialorder %v344, 8.507059e+37
  %v346 = vand.u32 %v151, 2147483648
  %v347 = vor.u32 1.1754944e-38, %v346
  %v348 = vsel %vm345, %v347, %v343
  %v349 = vmul.f32 1.0, %v348
  %v350 = vrcp.pop %v152
  %v351 = vmul.f32 %v152, %v350
  %v352 = vsub.f32 1.0, %v351
  %v353 = vmul.f32 %v350, %v352
  %v354 = vadd.f32 %v350, %v353
  %vm355 = vweird.f32 %v152
  %vm356 = vweird.f32 %v350
  %vm357 = vmor %vm355, %vm356
  %v358 = vsel %vm357, %v350, %v354
  %v359 = vand.u32 2147483647, %v152
  %vm360 = vcmp.eq.f32.partialorder %v359, 8.507059e+37
  %v361 = vand.u32 %v152, 2147483648
  %v362 = vor.u32 1.1754944e-38, %v361
  %v363 = vsel %vm360, %v362, %v358
  %v364 = vmul.f32 1.0, %v363
  %v365 = vrcp.pop %v153
  %v366 = vmul.f32 %v153, %v365
  %v367 = vsub.f32 1.0, %v366
  %v368 = vmul.f32 %v365, %v367
  %v369 = vadd.f32 %v365, %v368
  %vm370 = vweird.f32 %v153
  %vm371 = vweird.f32 %v365
  %vm372 = vmor %vm370, %vm371
  %v373 = vsel %vm372, %v365, %v369
  %v374 = vand.u32 2147483647, %v153
  %vm375 = vcmp.eq.f32.partialorder %v374, 8.507059e+37
  %v376 = vand.u32 %v153, 2147483648
  %v377 = vor.u32 1.1754944e-38, %v376
  %v378 = vsel %vm375, %v377, %v373
  %v379 = vmul.f32 1.0, %v378
  %v380 = vrcp.pop %v154
  %v381 = vmul.f32 %v154, %v380
  %v382 = vsub.f32 1.0, %v381
  %v383 = vmul.f32 %v380, %v382
  %v384 = vadd.f32 %v380, %v383
  %vm385 = vweird.f32 %v154
  %vm386 = vweird.f32 %v380
  %vm387 = vmor %vm385, %vm386
  %v388 = vsel %vm387, %v380, %v384
  %v389 = vand.u32 2147483647, %v154
  %vm390 = vcmp.eq.f32.partialorder %v389, 8.507059e+37
  %v391 = vand.u32 %v154, 2147483648
  %v392 = vor.u32 1.1754944e-38, %v391
  %v393 = vsel %vm390, %v392, %v388
  %v394 = vmul.f32 1.0, %v393
  %v411 = vlaneseq
  %v412 = vand.u32 %v411, 127
  %v413 = vperm.slane %v169, %v412
  %v414 = vadd.s32 %v412, 4294967288
  %v415 = vperm.slane %v184, %v414
  %vm416 = vcmask 130112
  %v417 = vsel %vm416, %v415, %v413
  %v418 = vadd.s32 %v412, 4294967280
  %v419 = vperm.slane %v199, %v418
  %vm420 = vcmask 195712
  %v421 = vsel %vm420, %v419, %v417
  %v422 = vadd.s32 %v412, 4294967272
  %v423 = vperm.slane %v214, %v422
  %vm424 = vcmask 261312
  %v425 = vsel %vm424, %v423, %v421
  %v426 = vadd.s32 %v412, 4294967264
  %v427 = vperm.slane %v229, %v426
  %vm428 = vcmask 326912
  %v429 = vsel %vm428, %v427, %v425
  %v430 = vadd.s32 %v412, 4294967256
  %v431 = vperm.slane %v244, %v430
  %vm432 = vcmask 392512
  %v433 = vsel %vm432, %v431, %v429
  %v434 = vadd.s32 %v412, 4294967248
  %v435 = vperm.slane %v259, %v434
  %vm436 = vcmask 458112
  %v437 = vsel %vm436, %v435, %v433
  %v438 = vadd.s32 %v412, 4294967240
  %v439 = vperm.slane %v274, %v438
  %vm440 = vcmask 523712
  %v441 = vsel %vm440, %v439, %v437
  %v442 = vadd.s32 %v412, 4294967232
  %v443 = vperm.slane %v289, %v442
  %vm444 = vcmask 589312
  %v445 = vsel %vm444, %v443, %v441
  %v446 = vadd.s32 %v412, 4294967224
  %v447 = vperm.slane %v304, %v446
  %vm448 = vcmask 654912
  %v449 = vsel %vm448, %v447, %v445
  %v450 = vadd.s32 %v412, 4294967216
  %v451 = vperm.slane %v319, %v450
  %vm452 = vcmask 720512
  %v453 = vsel %vm452, %v451, %v449
  %v454 = vadd.s32 %v412, 4294967208
  %v455 = vperm.slane %v334, %v454
  %vm456 = vcmask 786112
  %v457 = vsel %vm456, %v455, %v453
  %v458 = vadd.s32 %v412, 4294967200
  %v459 = vperm.slane %v349, %v458
  %vm460 = vcmask 851712
  %v461 = vsel %vm460, %v459, %v457
  %v462 = vadd.s32 %v412, 4294967192
  %v463 = vperm.slane %v364, %v462
  %vm464 = vcmask 917312
  %v465 = vsel %vm464, %v463, %v461
  %v466 = vadd.s32 %v412, 4294967184
  %v467 = vperm.slane %v379, %v466
  %vm468 = vcmask 982912
  %v469 = vsel %vm468, %v467, %v465
  %v470 = vadd.s32 %v412, 4294967176
  %v471 = vperm.slane %v394, %v470
  %vm472 = vcmask 1048512
  %v473 = vsel %vm472, %v471, %v469
  %475 = vst [vmem:[%s2] sm:$0x1] %v473
  // Predicated region
  $region10: #{gdrnet_forward.3} parent=0 // pred_check
    _
  $region11: #{gdrnet_forward.3} parent=0 // pred_check_branch
    %477 = sbr.rel (0) target = $region13
  $region12: #{gdrnet_forward.3} parent=0 // pred_region
    _
  $region13: #{gdrnet_forward.3} parent=0 // pred_fallthru
    _
  // Predicated region
  $region14: #{gdrnet_forward.3} parent=0 // pred_check
    _
  $region15: #{gdrnet_forward.3} parent=0 // pred_check_branch
    %479 = sbr.rel (0) target = $region17
  $region16: #{gdrnet_forward.3} parent=0 // pred_region
    _
  $region17: #{gdrnet_forward.3} parent=0 // pred_fallthru
    _

// kernel: gdrnet_forward.2
$region0: #{gdrnet_forward.2}
  #allocation0 [shape = 'u32[]', space=smem, size = 0x4, offset = 0x4, fixed_abs, tag = 'smem constant byte address 0x4 - core index']
  #allocation1 [shape = 'u32[72,128]{1,0:T(1,128)}', space=vmem, size = 0x9000, scoped, tag = 'internal scratch']
  %s0 = inlined_call_operand.vmem [shape: f32[32,16], index: 0, kind: input, shape index: {}]
  %s1 = inlined_call_operand.vmem [shape: f32[32,16], index: 1, kind: input, shape index: {}]
  %s2 = inlined_call_operand.vmem [shape: f32[32,16], index: 2, kind: input, shape index: {}]
  %s3 = inlined_call_operand.vmem [shape: f32[3,16,32], index: 3, kind: input, shape index: {}]
  %s4 = inlined_call_operand.vmem [shape: f32[3,1,32], index: 4, kind: input, shape index: {}]
  %s5 = inlined_call_operand.vmem [shape: f32[3,32,128], index: 5, kind: input, shape index: {}]
  %s6 = inlined_call_operand.vmem [shape: f32[1,128], index: 6, kind: input, shape index: {}]
  %s7 = inlined_call_operand.vmem [shape: f32[128,128], index: 7, kind: input, shape index: {}]
  %s8 = inlined_call_operand.vmem [shape: f32[32,128], index: 8, kind: output, shape index: {0}]
  %s9 = inlined_call_operand.vmem [shape: f32[32,128], index: 9, kind: output, shape index: {1}]
  %10 = xla_tuple %s8, %s9
  %s11 = sld [smem:[#allocation0]]
  $region50: #{gdrnet_forward.2} parent=0
    _
  %s13 = ssub.s32 1, %s11
  %s14 = scalar_select 0, %s13, %s11
  // Predicated region
  $region2: #{gdrnet_forward.2} parent=0 // pred_check
    _
  $region3: #{gdrnet_forward.2} parent=0 // pred_check_branch
    %16 = sbr.rel (0) target = $region5
  $region4: #{gdrnet_forward.2} parent=0 // pred_region
    _
  $region5: #{gdrnet_forward.2} parent=0 // pred_fallthru
    _
  // Predicated region
  $region6: #{gdrnet_forward.2} parent=0 // pred_check
    _
  $region7: #{gdrnet_forward.2} parent=0 // pred_check_branch
    %18 = sbr.rel (0) target = $region9
  $region8: #{gdrnet_forward.2} parent=0 // pred_region
    _
  $region9: #{gdrnet_forward.2} parent=0 // pred_fallthru
    _
  // Predicated region
  $region10: #{gdrnet_forward.2} parent=0 // pred_check
    _
  $region11: #{gdrnet_forward.2} parent=0 // pred_check_branch
    %20 = sbr.rel (0) target = $region13
  $region12: #{gdrnet_forward.2} parent=0 // pred_region
    _
  $region13: #{gdrnet_forward.2} parent=0 // pred_fallthru
    _
  // Predicated region
  $region14: #{gdrnet_forward.2} parent=0 // pred_check
    _
  $region15: #{gdrnet_forward.2} parent=0 // pred_check_branch
    %22 = sbr.rel (0) target = $region17
  $region16: #{gdrnet_forward.2} parent=0 // pred_region
    _
  $region17: #{gdrnet_forward.2} parent=0 // pred_fallthru
    _
  // Predicated region
  $region18: #{gdrnet_forward.2} parent=0 // pred_check
    _
  $region19: #{gdrnet_forward.2} parent=0 // pred_check_branch
    %24 = sbr.rel (0) target = $region21
  $region20: #{gdrnet_forward.2} parent=0 // pred_region
    _
  $region21: #{gdrnet_forward.2} parent=0 // pred_fallthru
    _
  // Predicated region
  $region22: #{gdrnet_forward.2} parent=0 // pred_check
    _
  $region23: #{gdrnet_forward.2} parent=0 // pred_check_branch
    %26 = sbr.rel (0) target = $region25
  $region24: #{gdrnet_forward.2} parent=0 // pred_region
    _
  $region25: #{gdrnet_forward.2} parent=0 // pred_fallthru
    _
  // Predicated region
  $region26: #{gdrnet_forward.2} parent=0 // pred_check
    _
  $region27: #{gdrnet_forward.2} parent=0 // pred_check_branch
    %28 = sbr.rel (0) target = $region29
  $region28: #{gdrnet_forward.2} parent=0 // pred_region
    _
  $region29: #{gdrnet_forward.2} parent=0 // pred_fallthru
    _
  // Predicated region
  $region30: #{gdrnet_forward.2} parent=0 // pred_check
    _
  $region31: #{gdrnet_forward.2} parent=0 // pred_check_branch
    %30 = sbr.rel (0) target = $region33
  $region32: #{gdrnet_forward.2} parent=0 // pred_region
    _
  $region33: #{gdrnet_forward.2} parent=0 // pred_fallthru
    _
  %v31 = vld [vmem:[%s0] sm:$0xff]
  %v32 = vld [vmem:[%s0 + $0x8] sm:$0xff]
  %v33 = vld [vmem:[%s0 + $0x10] sm:$0xff]
  %v34 = vld [vmem:[%s0 + $0x18] sm:$0xff]
  %v35 = vld [vmem:[%s3] sm:$0xff]
  %v36 = vld [vmem:[%s3 + $0x8] sm:$0xff]
  %v37 = vld [vmem:[%s4] sm:$0x1]
  %v39 = vperm.slane %v37, 0
  %vm41 = vcmask 130048
  %v43 = vsel %vm41, %v31, 0
  %v46 = vsel %vm41, %v32, 0
  %v49 = vsel %vm41, %v33, 0
  %v52 = vsel %vm41, %v34, 0
  %54 = vmatpush.msra.mxu0 0.0
  %55 = vmatpush.msra.mxu0 0.0
  %56 = vmatpush.msra.mxu0 0.0
  %57 = vmatpush.msra.mxu0 0.0
  %58 = vmatpush.msra.mxu0 0.0
  %59 = vmatpush.msra.mxu0 0.0
  %60 = vmatpush.msra.mxu0 0.0
  %61 = vmatpush.msra.mxu0 0.0
  %62 = vmatpush.msra.mxu0 0.0
  %63 = vmatpush.msra.mxu0 0.0
  %64 = vmatpush.msra.mxu0 0.0
  %65 = vmatpush.msra.mxu0 0.0
  %66 = vmatpush.msra.mxu0 0.0
  %67 = vmatpush.msra.mxu0 0.0
  %68 = vmatpush.msra.mxu0 %v36
  %69 = vmatpush.msra.mxu0 %v35
  %70 = vmatmul.f32.gmra.mxu0 %v43
  %v71 = vpop.f32.mrf.mxu0
  %v72 = vadd.f32 %v39, %v71
  %73 = vmatmul.f32.gmra.mxu0 %v46
  %v74 = vpop.f32.mrf.mxu0
  %v75 = vadd.f32 %v39, %v74
  %76 = vmatmul.f32.gmra.mxu0 %v49
  %v77 = vpop.f32.mrf.mxu0
  %v78 = vadd.f32 %v39, %v77
  %79 = vmatmul.f32.gmra.mxu0 %v52
  %v80 = vpop.f32.mrf.mxu0
  %v81 = vadd.f32 %v39, %v80
  %82 = vdwg.mxu0
  %v83 = vtanh.pop %v72
  %v84 = vtanh.pop %v75
  %v85 = vtanh.pop %v78
  %v86 = vtanh.pop %v81
  %v87 = vld [vmem:[%s5] sm:$0xff]
  %v88 = vld [vmem:[%s5 + $0x8] sm:$0xff]
  %v89 = vld [vmem:[%s5 + $0x10] sm:$0xff]
  %v90 = vld [vmem:[%s5 + $0x18] sm:$0xff]
  %v91 = vld [vmem:[%s1] sm:$0xff]
  %v92 = vld [vmem:[%s1 + $0x8] sm:$0xff]
  %v93 = vld [vmem:[%s1 + $0x10] sm:$0xff]
  %v94 = vld [vmem:[%s1 + $0x18] sm:$0xff]
  %s95 = scalar_lea.vmem %s3, 16
  %v96 = vld [vmem:[%s95] sm:$0xff]
  %v97 = vld [vmem:[%s95 + $0x8] sm:$0xff]
  %s98 = scalar_lea.vmem %s4, 1
  %v99 = vld [vmem:[%s98] sm:$0x1]
  %v101 = vperm.slane %v99, 0
  %v104 = vsel %vm41, %v91, 0
  %v107 = vsel %vm41, %v92, 0
  %v110 = vsel %vm41, %v93, 0
  %v113 = vsel %vm41, %v94, 0
  %115 = vmatpush.msra.mxu0 0.0
  %116 = vmatpush.msra.mxu0 0.0
  %117 = vmatpush.msra.mxu0 0.0
  %118 = vmatpush.msra.mxu0 0.0
  %119 = vmatpush.msra.mxu0 0.0
  %120 = vmatpush.msra.mxu0 0.0
  %121 = vmatpush.msra.mxu0 0.0
  %122 = vmatpush.msra.mxu0 0.0
  %123 = vmatpush.msra.mxu0 0.0
  %124 = vmatpush.msra.mxu0 0.0
  %125 = vmatpush.msra.mxu0 0.0
  %126 = vmatpush.msra.mxu0 0.0
  %127 = vmatpush.msra.mxu0 0.0
  %128 = vmatpush.msra.mxu0 0.0
  %129 = vmatpush.msra.mxu0 %v97
  %130 = vmatpush.msra.mxu0 %v96
  %131 = vmatmul.f32.gmra.mxu0 %v104
  %v132 = vpop.f32.mrf.mxu0
  %v133 = vadd.f32 %v101, %v132
  %134 = vmatmul.f32.gmra.mxu0 %v107
  %v135 = vpop.f32.mrf.mxu0
  %v136 = vadd.f32 %v101, %v135
  %137 = vmatmul.f32.gmra.mxu0 %v110
  %v138 = vpop.f32.mrf.mxu0
  %v139 = vadd.f32 %v101, %v138
  %140 = vmatmul.f32.gmra.mxu0 %v113
  %v141 = vpop.f32.mrf.mxu0
  %v142 = vadd.f32 %v101, %v141
  %143 = vdwg.mxu0
  %v144 = vtanh.pop %v133
  %v145 = vtanh.pop %v136
  %v146 = vtanh.pop %v139
  %v147 = vtanh.pop %v142
  %s148 = scalar_lea.vmem %s5, 32
  %v149 = vld [vmem:[%s148] sm:$0xff]
  %v150 = vld [vmem:[%s148 + $0x8] sm:$0xff]
  %v151 = vld [vmem:[%s148 + $0x10] sm:$0xff]
  %v152 = vld [vmem:[%s148 + $0x18] sm:$0xff]
  %vm153 = vcmask 261120
  %v155 = vsel %vm153, %v144, 0
  %v158 = vsel %vm153, %v145, 0
  %v161 = vsel %vm153, %v146, 0
  %v164 = vsel %vm153, %v147, 0
  %166 = vmatpush.msra.mxu0 0.0
  %167 = vmatpush.msra.mxu0 0.0
  %168 = vmatpush.msra.mxu0 0.0
  %169 = vmatpush.msra.mxu0 0.0
  %170 = vmatpush.msra.mxu0 0.0
  %171 = vmatpush.msra.mxu0 0.0
  %172 = vmatpush.msra.mxu0 0.0
  %173 = vmatpush.msra.mxu0 0.0
  %174 = vmatpush.msra.mxu0 0.0
  %175 = vmatpush.msra.mxu0 0.0
  %176 = vmatpush.msra.mxu0 0.0
  %177 = vmatpush.msra.mxu0 0.0
  %178 = vmatpush.msra.mxu0 %v152
  %179 = vmatpush.msra.mxu0 %v151
  %180 = vmatpush.msra.mxu0 %v150
  %181 = vmatpush.msra.mxu0 %v149
  %182 = vmatmul.f32.gmra.mxu0 %v155
  %v183 = vpop.f32.mrf.mxu0
  %v184 = vadd.f32 0.0, %v183
  %185 = vmatmul.f32.gmra.mxu0 %v158
  %v186 = vpop.f32.mrf.mxu0
  %v187 = vadd.f32 0.0, %v186
  %188 = vmatmul.f32.gmra.mxu0 %v161
  %v189 = vpop.f32.mrf.mxu0
  %v190 = vadd.f32 0.0, %v189
  %191 = vmatmul.f32.gmra.mxu0 %v164
  %v192 = vpop.f32.mrf.mxu0
  %v193 = vadd.f32 0.0, %v192
  %194 = vdwg.mxu0
  %v196 = vsel %vm153, %v83, 0
  %v199 = vsel %vm153, %v84, 0
  %v202 = vsel %vm153, %v85, 0
  %v205 = vsel %vm153, %v86, 0
  %207 = vmatpush.msra.mxu0 0.0
  %208 = vmatpush.msra.mxu0 0.0
  %209 = vmatpush.msra.mxu0 0.0
  %210 = vmatpush.msra.mxu0 0.0
  %211 = vmatpush.msra.mxu0 0.0
  %212 = vmatpush.msra.mxu0 0.0
  %213 = vmatpush.msra.mxu0 0.0
  %214 = vmatpush.msra.mxu0 0.0
  %215 = vmatpush.msra.mxu0 0.0
  %216 = vmatpush.msra.mxu0 0.0
  %217 = vmatpush.msra.mxu0 0.0
  %218 = vmatpush.msra.mxu0 0.0
  %219 = vmatpush.msra.mxu0 %v90
  %220 = vmatpush.msra.mxu0 %v89
  %221 = vmatpush.msra.mxu0 %v88
  %222 = vmatpush.msra.mxu0 %v87
  %223 = vmatmul.f32.gmra.mxu0 %v196
  %v224 = vpop.f32.mrf.mxu0
  %v225 = vadd.f32 %v184, %v224
  %226 = vmatmul.f32.gmra.mxu0 %v199
  %v227 = vpop.f32.mrf.mxu0
  %v228 = vadd.f32 %v187, %v227
  %229 = vmatmul.f32.gmra.mxu0 %v202
  %v230 = vpop.f32.mrf.mxu0
  %v231 = vadd.f32 %v190, %v230
  %232 = vmatmul.f32.gmra.mxu0 %v205
  %v233 = vpop.f32.mrf.mxu0
  %v234 = vadd.f32 %v193, %v233
  %235 = vdwg.mxu0
  %v236 = vld [vmem:[%s2] sm:$0xff]
  %v237 = vld [vmem:[%s2 + $0x8] sm:$0xff]
  %v238 = vld [vmem:[%s2 + $0x10] sm:$0xff]
  %v239 = vld [vmem:[%s2 + $0x18] sm:$0xff]
  %s240 = scalar_lea.vmem %s3, 32
  %v241 = vld [vmem:[%s240] sm:$0xff]
  %v242 = vld [vmem:[%s240 + $0x8] sm:$0xff]
  %s243 = scalar_lea.vmem %s4, 2
  %v244 = vld [vmem:[%s243] sm:$0x1]
  %v246 = vperm.slane %v244, 0
  %v249 = vsel %vm41, %v236, 0
  %v252 = vsel %vm41, %v237, 0
  %v255 = vsel %vm41, %v238, 0
  %v258 = vsel %vm41, %v239, 0
  %260 = vmatpush.msra.mxu0 0.0
  %261 = vmatpush.msra.mxu0 0.0
  %262 = vmatpush.msra.mxu0 0.0
  %263 = vmatpush.msra.mxu0 0.0
  %264 = vmatpush.msra.mxu0 0.0
  %265 = vmatpush.msra.mxu0 0.0
  %266 = vmatpush.msra.mxu0 0.0
  %267 = vmatpush.msra.mxu0 0.0
  %268 = vmatpush.msra.mxu0 0.0
  %269 = vmatpush.msra.mxu0 0.0
  %270 = vmatpush.msra.mxu0 0.0
  %271 = vmatpush.msra.mxu0 0.0
  %272 = vmatpush.msra.mxu0 0.0
  %273 = vmatpush.msra.mxu0 0.0
  %274 = vmatpush.msra.mxu0 %v242
  %275 = vmatpush.msra.mxu0 %v241
  %276 = vmatmul.f32.gmra.mxu0 %v249
  %v277 = vpop.f32.mrf.mxu0
  %v278 = vadd.f32 %v246, %v277
  %279 = vmatmul.f32.gmra.mxu0 %v252
  %v280 = vpop.f32.mrf.mxu0
  %v281 = vadd.f32 %v246, %v280
  %282 = vmatmul.f32.gmra.mxu0 %v255
  %v283 = vpop.f32.mrf.mxu0
  %v284 = vadd.f32 %v246, %v283
  %285 = vmatmul.f32.gmra.mxu0 %v258
  %v286 = vpop.f32.mrf.mxu0
  %v287 = vadd.f32 %v246, %v286
  %288 = vdwg.mxu0
  %v289 = vtanh.pop %v278
  %v290 = vtanh.pop %v281
  %v291 = vtanh.pop %v284
  %v292 = vtanh.pop %v287
  %s293 = scalar_lea.vmem %s5, 64
  %v294 = vld [vmem:[%s293] sm:$0xff]
  %v295 = vld [vmem:[%s293 + $0x8] sm:$0xff]
  %v296 = vld [vmem:[%s293 + $0x10] sm:$0xff]
  %v297 = vld [vmem:[%s293 + $0x18] sm:$0xff]
  %v299 = vsel %vm153, %v289, 0
  %v302 = vsel %vm153, %v290, 0
  %v305 = vsel %vm153, %v291, 0
  %v308 = vsel %vm153, %v292, 0
  %310 = vmatpush.msra.mxu0 0.0
  %311 = vmatpush.msra.mxu0 0.0
  %312 = vmatpush.msra.mxu0 0.0
  %313 = vmatpush.msra.mxu0 0.0
  %314 = vmatpush.msra.mxu0 0.0
  %315 = vmatpush.msra.mxu0 0.0
  %316 = vmatpush.msra.mxu0 0.0
  %317 = vmatpush.msra.mxu0 0.0
  %318 = vmatpush.msra.mxu0 0.0
  %319 = vmatpush.msra.mxu0 0.0
  %320 = vmatpush.msra.mxu0 0.0
  %321 = vmatpush.msra.mxu0 0.0
  %322 = vmatpush.msra.mxu0 %v297
  %323 = vmatpush.msra.mxu0 %v296
  %324 = vmatpush.msra.mxu0 %v295
  %325 = vmatpush.msra.mxu0 %v294
  %326 = vmatmul.f32.gmra.mxu0 %v299
  %v327 = vpop.f32.mrf.mxu0
  %v328 = vadd.f32 0.0, %v327
  %329 = vmatmul.f32.gmra.mxu0 %v302
  %v330 = vpop.f32.mrf.mxu0
  %v331 = vadd.f32 0.0, %v330
  %332 = vmatmul.f32.gmra.mxu0 %v305
  %v333 = vpop.f32.mrf.mxu0
  %v334 = vadd.f32 0.0, %v333
  %335 = vmatmul.f32.gmra.mxu0 %v308
  %v336 = vpop.f32.mrf.mxu0
  %v337 = vadd.f32 0.0, %v336
  %338 = vdwg.mxu0
  %v339 = vadd.f32 %v225, %v328
  %v340 = vadd.f32 %v228, %v331
  %v341 = vadd.f32 %v231, %v334
  %v342 = vadd.f32 %v234, %v337
  %v343 = vld [vmem:[%s6] sm:$0x1]
  %v345 = vperm.slane %v343, 0
  %v347 = vadd.f32 %v339, %v345
  %v348 = vadd.f32 %v340, %v345
  %v349 = vadd.f32 %v341, %v345
  %v350 = vadd.f32 %v342, %v345
  %vm351 = vcmp.ge.f32.partialorder %v347, 0.0
  %vm352 = vcmp.ge.f32.partialorder %v348, 0.0
  %vm353 = vcmp.ge.f32.partialorder %v349, 0.0
  %vm354 = vcmp.ge.f32.partialorder %v350, 0.0
  %v355 = vmul.f32 %v347, 0.01
  %v356 = vmul.f32 %v348, 0.01
  %v357 = vmul.f32 %v349, 0.01
  %v358 = vmul.f32 %v350, 0.01
  %v359 = vsel %vm351, %v347, %v355
  %v360 = vsel %vm352, %v348, %v356
  %v361 = vsel %vm353, %v349, %v357
  %v362 = vsel %vm354, %v350, %v358
  %363 = vst [vmem:[%s8] sm:$0xff] %v359
  %364 = vst [vmem:[%s8 + $0x8] sm:$0xff] %v360
  %365 = vst [vmem:[%s8 + $0x10] sm:$0xff] %v361
  %366 = vst [vmem:[%s8 + $0x18] sm:$0xff] %v362
  %v367 = vld [vmem:[%s7] sm:$0xff]
  %v368 = vld [vmem:[%s7 + $0x8] sm:$0xff]
  %v369 = vld [vmem:[%s7 + $0x10] sm:$0xff]
  %v370 = vld [vmem:[%s7 + $0x18] sm:$0xff]
  %v371 = vld [vmem:[%s7 + $0x20] sm:$0xff]
  %v372 = vld [vmem:[%s7 + $0x28] sm:$0xff]
  %v373 = vld [vmem:[%s7 + $0x30] sm:$0xff]
  %v374 = vld [vmem:[%s7 + $0x38] sm:$0xff]
  %v375 = vld [vmem:[%s7 + $0x40] sm:$0xff]
  %v376 = vld [vmem:[%s7 + $0x48] sm:$0xff]
  %v377 = vld [vmem:[%s7 + $0x50] sm:$0xff]
  %v378 = vld [vmem:[%s7 + $0x58] sm:$0xff]
  %v379 = vld [vmem:[%s7 + $0x60] sm:$0xff]
  %v380 = vld [vmem:[%s7 + $0x68] sm:$0xff]
  %v381 = vld [vmem:[%s7 + $0x70] sm:$0xff]
  %v382 = vld [vmem:[%s7 + $0x78] sm:$0xff]
  %383 = vmatpush.msra.mxu0 %v382
  %384 = vmatpush.msra.mxu0 %v381
  %385 = vmatpush.msra.mxu0 %v380
  %386 = vmatpush.msra.mxu0 %v379
  %387 = vmatpush.msra.mxu0 %v378
  %388 = vmatpush.msra.mxu0 %v377
  %389 = vmatpush.msra.mxu0 %v376
  %390 = vmatpush.msra.mxu0 %v375
  %391 = vmatpush.msra.mxu0 %v374
  %392 = vmatpush.msra.mxu0 %v373
  %393 = vmatpush.msra.mxu0 %v372
  %394 = vmatpush.msra.mxu0 %v371
  %395 = vmatpush.msra.mxu0 %v370
  %396 = vmatpush.msra.mxu0 %v369
  %397 = vmatpush.msra.mxu0 %v368
  %398 = vmatpush.msra.mxu0 %v367
  %399 = vmatmul.f32.gmra.mxu0 %v359
  %v400 = vpop.f32.mrf.mxu0
  %v401 = vadd.f32 0.0, %v400
  %402 = vmatmul.f32.gmra.mxu0 %v360
  %v403 = vpop.f32.mrf.mxu0
  %v404 = vadd.f32 0.0, %v403
  %405 = vmatmul.f32.gmra.mxu0 %v361
  %v406 = vpop.f32.mrf.mxu0
  %v407 = vadd.f32 0.0, %v406
  %408 = vmatmul.f32.gmra.mxu0 %v362
  %v409 = vpop.f32.mrf.mxu0
  %v410 = vadd.f32 0.0, %v409
  %411 = vdwg.mxu0
  %412 = vst [vmem:[%s9] sm:$0xff] %v401
  %413 = vst [vmem:[%s9 + $0x8] sm:$0xff] %v404
  %414 = vst [vmem:[%s9 + $0x10] sm:$0xff] %v407
  %415 = vst [vmem:[%s9 + $0x18] sm:$0xff] %v410
  // Predicated region
  $region34: #{gdrnet_forward.2} parent=0 // pred_check
    _
  $region35: #{gdrnet_forward.2} parent=0 // pred_check_branch
    %417 = sbr.rel (0) target = $region37
  $region36: #{gdrnet_forward.2} parent=0 // pred_region
    _
  $region37: #{gdrnet_forward.2} parent=0 // pred_fallthru
    _
  // Predicated region
  $region38: #{gdrnet_forward.2} parent=0 // pred_check
    _
  $region39: #{gdrnet_forward.2} parent=0 // pred_check_branch
    %419 = sbr.rel (0) target = $region41
  $region40: #{gdrnet_forward.2} parent=0 // pred_region
    _
  $region41: #{gdrnet_forward.2} parent=0 // pred_fallthru
    _
  // Predicated region
  $region42: #{gdrnet_forward.2} parent=0 // pred_check
    _
  $region43: #{gdrnet_forward.2} parent=0 // pred_check_branch
    %421 = sbr.rel (0) target = $region45
  $region44: #{gdrnet_forward.2} parent=0 // pred_region
    _
  $region45: #{gdrnet_forward.2} parent=0 // pred_fallthru
    _
  // Predicated region
  $region46: #{gdrnet_forward.2} parent=0 // pred_check
    _
  $region47: #{gdrnet_forward.2} parent=0 // pred_check_branch
    %423 = sbr.rel (0) target = $region49
  $region48: #{gdrnet_forward.2} parent=0 // pred_region
    _
  $region49: #{gdrnet_forward.2} parent=0 // pred_fallthru
    _

</llo_original>
